<compile_context>
chip_gen: v7x
topology: tpu7x:2x2x1
jax: 0.10.0
libtpu: 0.0.40
codegen_flags: <defaults>
</compile_context>

<pallas_src>
import functools

import jax
import jax.numpy as jnp
from jax.experimental import pallas as pl
from jax.experimental.pallas import tpu as pltpu


def hbmnet_t_kernel(x_ref, w1_ref, bias1_ref, w2_ref, b2_ref, o_ref):
    # ---- Linear(tdim -> 128) with BN folded into W1/bias ----
    h = jnp.dot(x_ref[...], w1_ref[...], preferred_element_type=jnp.float32)
    # ---- bias + BN shift, then ReLU (Dropout is identity in eval mode) ----
    h = jnp.maximum(h + bias1_ref[...], 0.0)
    # ---- Linear(128 -> nclasses_padded) ----
    out = jnp.dot(h.astype(w2_ref.dtype), w2_ref[...],
                  preferred_element_type=jnp.float32)
    o_ref[...] = (out + b2_ref[...]).astype(o_ref.dtype)


def hbmnet_t_forward(x, params, *, tile_b=512, compute_dtype=jnp.bfloat16):
    """x: (B, tdim) float32 ('tweet' features). Returns (B, nclasses) float32."""
    w1, b1 = params["w1"], params["b1"]
    gamma, beta = params["gamma"], params["beta"]
    rmean, rvar = params["rmean"], params["rvar"]
    w2, b2 = params["w2"], params["b2"]

    B, tdim = x.shape
    hidden = w1.shape[0]                      # 128
    nclasses = w2.shape[0]
    # Pad output feature dim to a multiple of 128 for lane-dense stores.
    npad = max(128, ((nclasses + 127) // 128) * 128)

    # Fold BN (eval mode) + first bias into W1/bias:
    #   bn(x @ W1^T + b1) = x @ (W1^T * scale) + (b1 * scale + shift)
    eps = 1e-5
    scale = gamma / jnp.sqrt(rvar + eps)                     # (128,)
    shift = beta - rmean * scale                             # (128,)
    w1_eff = (w1.T * scale[None, :]).astype(compute_dtype)   # (tdim, 128)
    bias1 = (b1 * scale + shift).reshape(1, hidden).astype(jnp.float32)

    # Second linear, zero-padded to npad output lanes.
    w2_pad = jnp.zeros((hidden, npad), compute_dtype)
    w2_pad = w2_pad.at[:, :nclasses].set(w2.T.astype(compute_dtype))
    b2_pad = jnp.zeros((1, npad), jnp.float32).at[:, :nclasses].set(b2)

    x_c = x.astype(compute_dtype)

    # Batch tile: large to feed the MXU, clamped to B for small batches.
    tb = min(tile_b, B)
    grid = (pl.cdiv(B, tb),)

    bytes_in = compute_dtype.dtype.itemsize if hasattr(compute_dtype, "dtype") else 2
    cost = pl.CostEstimate(
        flops=2 * B * tdim * hidden + 2 * B * hidden * npad,
        transcendentals=0,
        bytes_accessed=(B * tdim + tdim * hidden + hidden * npad) * bytes_in
                       + (hidden + npad) * 4 + B * npad * 4,
    )

    out_padded = pl.pallas_call(
        hbmnet_t_kernel,
        out_shape=jax.ShapeDtypeStruct((B, npad), jnp.float32),
        grid_spec=pltpu.PrefetchScalarGridSpec(
            num_scalar_prefetch=0,
            grid=grid,
            in_specs=[
                pl.BlockSpec((tb, tdim), lambda i: (i, 0)),      # x tile
                pl.BlockSpec((tdim, hidden), lambda i: (0, 0)),  # W1_eff (resident)
                pl.BlockSpec((1, hidden), lambda i: (0, 0)),     # folded bias1
                pl.BlockSpec((hidden, npad), lambda i: (0, 0)),  # W2 padded (resident)
                pl.BlockSpec((1, npad), lambda i: (0, 0)),       # b2 padded
            ],
            out_specs=pl.BlockSpec((tb, npad), lambda i: (i, 0)),
        ),
        compiler_params=pltpu.CompilerParams(
            dimension_semantics=("parallel",)),
        cost_estimate=cost,
    )(x_c, w1_eff, bias1, w2_pad, b2_pad)

    return out_padded[:, :nclasses]


def init_params(key, tdim, nclasses, hidden=128):
    """Deterministic synthetic parameters (PyTorch-like uniform fan-in init)."""
    k1, k2, k3, k4 = jax.random.split(key, 4)
    bound1 = 1.0 / jnp.sqrt(tdim)
    bound2 = 1.0 / jnp.sqrt(hidden)
    return {
        "w1": jax.random.uniform(k1, (hidden, tdim), jnp.float32, -bound1, bound1),
        "b1": jax.random.uniform(k2, (hidden,), jnp.float32, -bound1, bound1),
        "gamma": jnp.ones((hidden,), jnp.float32),
        "beta": jnp.zeros((hidden,), jnp.float32),
        "rmean": jnp.zeros((hidden,), jnp.float32),
        "rvar": jnp.ones((hidden,), jnp.float32),
        "w2": jax.random.uniform(k3, (nclasses, hidden), jnp.float32, -bound2, bound2),
        "b2": jax.random.uniform(k4, (nclasses,), jnp.float32, -bound2, bound2),
    }


def reference_forward_f32(x, params):
    """Pure-f32 eval-mode reference (matches the PyTorch module in eval())."""
    eps = 1e-5
    h = x @ params["w1"].T + params["b1"]
    h = ((h - params["rmean"]) / jnp.sqrt(params["rvar"] + eps)
         * params["gamma"] + params["beta"])
    h = jnp.maximum(h, 0.0)
    return h @ params["w2"].T + params["b2"]


def reference_forward_bf16(x, params, compute_dtype=jnp.bfloat16):
    """Reference mirroring the kernel's bf16 operand / f32 accumulation path."""
    eps = 1e-5
    scale = params["gamma"] / jnp.sqrt(params["rvar"] + eps)
    shift = params["beta"] - params["rmean"] * scale
    w1_eff = (params["w1"].T * scale[None, :]).astype(compute_dtype)
    bias1 = params["b1"] * scale + shift
    h = jnp.dot(x.astype(compute_dtype), w1_eff,
                preferred_element_type=jnp.float32) + bias1
    h = jnp.maximum(h, 0.0)
    out = jnp.dot(h.astype(compute_dtype),
                  params["w2"].T.astype(compute_dtype),
                  preferred_element_type=jnp.float32) + params["b2"]
    return out


if __name__ == "__main__":
    key = jax.random.PRNGKey(0)
    k_param, k_data = jax.random.split(key)

    # Small shapes consistent with the module: tweet features (B, tdim).
    B, tdim, nclasses = 32, 32, 4
    params = init_params(k_param, tdim, nclasses)
    x = jax.random.normal(k_data, (B, tdim), jnp.float32)   # tfeat['tweet']

    # tile_b=16 here just to exercise a multi-step batch grid at small B;
    # production default is tile_b=512.
    fwd = functools.partial(hbmnet_t_forward, tile_b=16)
    out = jax.block_until_ready(fwd(x, params))

    assert out.shape == (B, nclasses)

    ref_bf16 = reference_forward_bf16(x, params)
    ref_f32 = reference_forward_f32(x, params)
    assert jnp.allclose(out, ref_bf16, atol=1e-2, rtol=1e-2), \
        "mismatch vs bf16-matched reference"
    assert jnp.allclose(out, ref_f32, atol=5e-2, rtol=5e-2), \
        "mismatch vs f32 reference"

    print("KERNEL_OK")
</pallas_src>

<mosaic_0001>
module attributes {stable_mosaic.version = 11 : i64} {
  func.func @hbmnet_t_kernel(%arg0: i32, %arg1: memref<16x32xbf16, #tpu.memory_space<vmem>>, %arg2: memref<32x128xbf16, #tpu.memory_space<vmem>>, %arg3: memref<1x128xf32, #tpu.memory_space<vmem>>, %arg4: memref<128x128xbf16, #tpu.memory_space<vmem>>, %arg5: memref<1x128xf32, #tpu.memory_space<vmem>>, %arg6: memref<16x128xf32, #tpu.memory_space<vmem>>) attributes {dimension_semantics = [#tpu.dimension_semantics<parallel>], iteration_bounds = array<i64: 2>, scalar_prefetch = 0 : i64, scratch_operands = 0 : i64, tpu.core_type = #tpu.core_type<tc>, window_params = [{transform_indices = @transform_0, window_bounds = array<i64: 16, 32>}, {pipeline_mode = #tpu.pipeline_mode<synchronous>, transform_indices = @transform_1, window_bounds = array<i64: 32, 128>}, {pipeline_mode = #tpu.pipeline_mode<synchronous>, transform_indices = @transform_2, window_bounds = array<i64: 1, 128>}, {pipeline_mode = #tpu.pipeline_mode<synchronous>, transform_indices = @transform_3, window_bounds = array<i64: 128, 128>}, {pipeline_mode = #tpu.pipeline_mode<synchronous>, transform_indices = @transform_4, window_bounds = array<i64: 1, 128>}, {transform_indices = @transform_5, window_bounds = array<i64: 16, 128>}]} {
    %c0 = arith.constant 0 : index
    %c0_0 = arith.constant 0 : index
    %0 = vector.load %arg1[%c0, %c0_0] : memref<16x32xbf16, #tpu.memory_space<vmem>>, vector<16x32xbf16>
    %c0_1 = arith.constant 0 : index
    %c0_2 = arith.constant 0 : index
    %1 = vector.load %arg2[%c0_1, %c0_2] : memref<32x128xbf16, #tpu.memory_space<vmem>>, vector<32x128xbf16>
    %cst = arith.constant dense<0.000000e+00> : vector<16x128xf32>
    %2 = tpu.matmul %0, %1, %cst {dimension_numbers = #tpu.dot_dimension_numbers<[1], [0], [0], [1], [0, 0, 1, 1], [], []>} : vector<16x32xbf16>, vector<32x128xbf16>, vector<16x128xf32> -> vector<16x128xf32>
    %c0_3 = arith.constant 0 : index
    %c0_4 = arith.constant 0 : index
    %3 = vector.load %arg3[%c0_3, %c0_4] : memref<1x128xf32, #tpu.memory_space<vmem>>, vector<1x128xf32>
    %4 = vector.broadcast %3 : vector<1x128xf32> to vector<16x128xf32>
    %5 = arith.addf %2, %4 : vector<16x128xf32>
    %cst_5 = arith.constant 0.000000e+00 : f32
    %6 = vector.broadcast %cst_5 : f32 to vector<16x128xf32>
    %7 = arith.maximumf %5, %6 : vector<16x128xf32>
    %8 = arith.truncf %7 : vector<16x128xf32> to vector<16x128xbf16>
    %c0_6 = arith.constant 0 : index
    %c0_7 = arith.constant 0 : index
    %9 = vector.load %arg4[%c0_6, %c0_7] : memref<128x128xbf16, #tpu.memory_space<vmem>>, vector<128x128xbf16>
    %cst_8 = arith.constant dense<0.000000e+00> : vector<16x128xf32>
    %10 = tpu.matmul %8, %9, %cst_8 {dimension_numbers = #tpu.dot_dimension_numbers<[1], [0], [0], [1], [0, 0, 1, 1], [], []>} : vector<16x128xbf16>, vector<128x128xbf16>, vector<16x128xf32> -> vector<16x128xf32>
    %c0_9 = arith.constant 0 : index
    %c0_10 = arith.constant 0 : index
    %11 = vector.load %arg5[%c0_9, %c0_10] : memref<1x128xf32, #tpu.memory_space<vmem>>, vector<1x128xf32>
    %12 = vector.broadcast %11 : vector<1x128xf32> to vector<16x128xf32>
    %13 = arith.addf %10, %12 : vector<16x128xf32>
    %c0_11 = arith.constant 0 : index
    %c0_12 = arith.constant 0 : index
    %14 = vector.load %arg6[%c0_11, %c0_12] : memref<16x128xf32, #tpu.memory_space<vmem>>, vector<16x128xf32>
    tpu.vector_store %arg6[%c0_11, %c0_12], %13 {strides = array<i32>} : memref<16x128xf32, #tpu.memory_space<vmem>>, vector<16x128xf32>,
    return
  }
  func.func @transform_0(%arg0: i32) -> (i32, i32) {
    %c0_i32 = arith.constant 0 : i32
    %c0_i32_0 = arith.constant 0 : i32
    return %arg0, %c0_i32 : i32, i32
  }
  func.func @transform_1(%arg0: i32) -> (i32, i32) {
    %c0_i32 = arith.constant 0 : i32
    %c0_i32_0 = arith.constant 0 : i32
    %c0_i32_1 = arith.constant 0 : i32
    return %c0_i32, %c0_i32_0 : i32, i32
  }
  func.func @transform_2(%arg0: i32) -> (i32, i32) {
    %c0_i32 = arith.constant 0 : i32
    %c0_i32_0 = arith.constant 0 : i32
    %c0_i32_1 = arith.constant 0 : i32
    return %c0_i32, %c0_i32_0 : i32, i32
  }
  func.func @transform_3(%arg0: i32) -> (i32, i32) {
    %c0_i32 = arith.constant 0 : i32
    %c0_i32_0 = arith.constant 0 : i32
    %c0_i32_1 = arith.constant 0 : i32
    return %c0_i32, %c0_i32_0 : i32, i32
  }
  func.func @transform_4(%arg0: i32) -> (i32, i32) {
    %c0_i32 = arith.constant 0 : i32
    %c0_i32_0 = arith.constant 0 : i32
    %c0_i32_1 = arith.constant 0 : i32
    return %c0_i32, %c0_i32_0 : i32, i32
  }
  func.func @transform_5(%arg0: i32) -> (i32, i32) {
    %c0_i32 = arith.constant 0 : i32
    %c0_i32_0 = arith.constant 0 : i32
    return %arg0, %c0_i32 : i32, i32
  }
}

</mosaic_0001>

<llo_original>
// kernel: tpu_custom_call.1
$region0: #{tpu_custom_call.1}
  #allocation0 [shape = 'u32[]', space=smem, size = 0x4, offset = 0x4, fixed_abs, tag = 'smem constant byte address 0x4 - core index']
  #allocation1 [shape = 'u32[144,128]{1,0:T(1,128)}', space=vmem, size = 0x12000, scoped, tag = 'internal scratch']
  %s0 = inlined_call_operand.hbm [shape: bf16[32,32], index: 0, kind: input, shape index: {}]
  %s1 = inlined_call_operand.hbm [shape: bf16[32,128], index: 1, kind: input, shape index: {}]
  %s2 = inlined_call_operand.vmem [shape: f32[1,128], index: 2, kind: input, shape index: {}]
  %s3 = inlined_call_operand.hbm [shape: bf16[128,128], index: 3, kind: input, shape index: {}]
  %s4 = inlined_call_operand.vmem [shape: f32[1,128], index: 4, kind: input, shape index: {}]
  %s5 = inlined_call_operand.hbm [shape: f32[32,128], index: 5, kind: output, shape index: {}]
  %s6 = sld [smem:[#allocation0]]
  $region65: #{tpu_custom_call.1} parent=0
    _
  %s8 = ssub.s32 1, %s6
  %s9 = scalar_select 0, %s8, %s6
  $region1: #{tpu_custom_call.1} parent=0
    #allocation2 [shape = 'u8[8192]{0}', space=vmem, size = 0x2000, scoped, tag = 'input window, operand 0']
    #allocation3 [shape = 's32[2]{0}', space=sflag, size = 0x8, scoped, tag = 'scoped memory for tpu_custom_call.1']
    #allocation4 [shape = 's32[2]{0}', space=sflag, size = 0x8, scoped, tag = 'scoped memory for tpu_custom_call.1']
    #allocation5 [shape = 'u8[8192]{0}', space=vmem, size = 0x2000, scoped, tag = 'input window, operand 1, single buffered']
    #allocation6 [shape = 's32[1]{0}', space=sflag, size = 0x4, scoped, tag = 'scoped memory for tpu_custom_call.1']
    #allocation7 [shape = 'u8[32768]{0}', space=vmem, size = 0x8000, scoped, tag = 'input window, operand 3, single buffered']
    #allocation8 [shape = 'u8[16384]{0}', space=vmem, size = 0x4000, scoped, tag = 'output window, operand 0']
    %10 = vsyncpa [#allocation3], 0
    %s11 = scalar_lea.sflag [#allocation3], 1
    %12 = vsyncpa %s11, 0
    %13 = vsyncpa [#allocation6], 0
    %14 = vsyncpa [#allocation4], 0
    %s15 = scalar_lea.sflag [#allocation4], 1
    %16 = vsyncpa %s15, 0
    loop: start=0, step=1, limit=4
    $region2: #{tpu_custom_call.1} parent=1 // loop_pre_header
      _
    $region3: #{tpu_custom_call.1} parent=1 // loop_header
      %s18 = sphi 0, %s22
      %p19 = scmp.ge.s32.totalorder %s18, 4
      %s28 = sphi 0, %s30
      %s31 = sphi 0, %s28
      %s32 = sphi 0, %s31
      %s48 = sphi 0, %s32
      %s52 = sphi 0, %s52
      %s54 = sphi 0, %s52
      %s55 = sphi 0, %s54
      %s69 = sphi 0, %s55
      %s73 = sphi 0, %s73
      %s75 = sphi 0, %s73
      %s76 = sphi 0, %s75
      %s90 = sphi 0, %s76
      %s94 = sphi 0, %s94
      %s96 = sphi 0, %s94
      %s97 = sphi 0, %s96
      %s111 = sphi 0, %s97
      %s115 = sphi 0, %s115
      %s117 = sphi 0, %s115
      %s118 = sphi 0, %s117
      %s132 = sphi 0, %s118
      %s138 = sphi 0, %s140
      %s141 = sphi 0, %s138
      %s142 = sphi 0, %s141
      %s158 = sphi 0, %s142
    $region4: #{tpu_custom_call.1} parent=1 // loop_header_branch
      %21 = sbr.rel (%p19) target = $region8
    $region5: #{tpu_custom_call.1} parent=1 // loop_body
      %s23 = ssub.s32 %s18, 1
      %s24 = ssub.s32 %s18, 2
      %s25 = sadd.s32 %s18, 1
      %s26 = ssub.s32 %s18, %s25
      %p27 = scmp.eq.s32.totalorder %s26, 0
      %s29 = sadd.s32 %s28, 1
      %s30 = scalar_select %p27, %s28, %s29
      %p33 = pneg %p27
      %p34 = scmp.eq.s32.totalorder %s18, 1
      %p35 = por %p33, %p34
      %p36 = scmp.ne.s32.totalorder %s28, %s31
      %p37 = scmp.eq.s32.totalorder %s18, 0
      %p38 = por %p36, %p37
      %p39 = scmp.ne.s32.totalorder %s28, %s31
      %p40 = scmp.eq.s32.totalorder %s23, 1
      %p41 = por %p39, %p40
      %p42 = scmp.ne.s32.totalorder %s31, %s32
      %p43 = scmp.eq.s32.totalorder %s23, 0
      %p44 = por %p42, %p43
      %p45 = scmp.ne.s32.totalorder %s31, %s32
      %p46 = scmp.eq.s32.totalorder %s24, 1
      %p47 = por %p45, %p46
      %p49 = scmp.ne.s32.totalorder %s32, %s48
      %p50 = scmp.eq.s32.totalorder %s24, 0
      %p51 = por %p49, %p50
      %s53 = sadd.s32 %s52, 1
      %p56 = scmp.eq.s32.totalorder %s18, 1
      %p57 = scmp.ne.s32.totalorder %s52, %s54
      %p58 = scmp.eq.s32.totalorder %s18, 0
      %p59 = por %p57, %p58
      %p60 = scmp.ne.s32.totalorder %s52, %s54
      %p61 = scmp.eq.s32.totalorder %s23, 1
      %p62 = por %p60, %p61
      %p63 = scmp.ne.s32.totalorder %s54, %s55
      %p64 = scmp.eq.s32.totalorder %s23, 0
      %p65 = por %p63, %p64
      %p66 = scmp.ne.s32.totalorder %s54, %s55
      %p67 = scmp.eq.s32.totalorder %s24, 1
      %p68 = por %p66, %p67
      %p70 = scmp.ne.s32.totalorder %s55, %s69
      %p71 = scmp.eq.s32.totalorder %s24, 0
      %p72 = por %p70, %p71
      %s74 = sadd.s32 %s73, 1
      %p77 = scmp.eq.s32.totalorder %s18, 1
      %p78 = scmp.ne.s32.totalorder %s73, %s75
      %p79 = scmp.eq.s32.totalorder %s18, 0
      %p80 = por %p78, %p79
      %p81 = scmp.ne.s32.totalorder %s73, %s75
      %p82 = scmp.eq.s32.totalorder %s23, 1
      %p83 = por %p81, %p82
      %p84 = scmp.ne.s32.totalorder %s75, %s76
      %p85 = scmp.eq.s32.totalorder %s23, 0
      %p86 = por %p84, %p85
      %p87 = scmp.ne.s32.totalorder %s75, %s76
      %p88 = scmp.eq.s32.totalorder %s24, 1
      %p89 = por %p87, %p88
      %p91 = scmp.ne.s32.totalorder %s76, %s90
      %p92 = scmp.eq.s32.totalorder %s24, 0
      %p93 = por %p91, %p92
      %s95 = sadd.s32 %s94, 1
      %p98 = scmp.eq.s32.totalorder %s18, 1
      %p99 = scmp.ne.s32.totalorder %s94, %s96
      %p100 = scmp.eq.s32.totalorder %s18, 0
      %p101 = por %p99, %p100
      %p102 = scmp.ne.s32.totalorder %s94, %s96
      %p103 = scmp.eq.s32.totalorder %s23, 1
      %p104 = por %p102, %p103
      %p105 = scmp.ne.s32.totalorder %s96, %s97
      %p106 = scmp.eq.s32.totalorder %s23, 0
      %p107 = por %p105, %p106
      %p108 = scmp.ne.s32.totalorder %s96, %s97
      %p109 = scmp.eq.s32.totalorder %s24, 1
      %p110 = por %p108, %p109
      %p112 = scmp.ne.s32.totalorder %s97, %s111
      %p113 = scmp.eq.s32.totalorder %s24, 0
      %p114 = por %p112, %p113
      %s116 = sadd.s32 %s115, 1
      %p119 = scmp.eq.s32.totalorder %s18, 1
      %p120 = scmp.ne.s32.totalorder %s115, %s117
      %p121 = scmp.eq.s32.totalorder %s18, 0
      %p122 = por %p120, %p121
      %p123 = scmp.ne.s32.totalorder %s115, %s117
      %p124 = scmp.eq.s32.totalorder %s23, 1
      %p125 = por %p123, %p124
      %p126 = scmp.ne.s32.totalorder %s117, %s118
      %p127 = scmp.eq.s32.totalorder %s23, 0
      %p128 = por %p126, %p127
      %p129 = scmp.ne.s32.totalorder %s117, %s118
      %p130 = scmp.eq.s32.totalorder %s24, 1
      %p131 = por %p129, %p130
      %p133 = scmp.ne.s32.totalorder %s118, %s132
      %p134 = scmp.eq.s32.totalorder %s24, 0
      %p135 = por %p133, %p134
      %s136 = ssub.s32 %s18, %s25
      %p137 = scmp.eq.s32.totalorder %s136, 0
      %s139 = sadd.s32 %s138, 1
      %s140 = scalar_select %p137, %s138, %s139
      %p143 = pneg %p137
      %p144 = scmp.eq.s32.totalorder %s18, 1
      %p145 = por %p143, %p144
      %p146 = scmp.ne.s32.totalorder %s138, %s141
      %p147 = scmp.eq.s32.totalorder %s18, 0
      %p148 = por %p146, %p147
      %p149 = scmp.ne.s32.totalorder %s138, %s141
      %p150 = scmp.eq.s32.totalorder %s23, 1
      %p151 = por %p149, %p150
      %p152 = scmp.ne.s32.totalorder %s141, %s142
      %p153 = scmp.eq.s32.totalorder %s23, 0
      %p154 = por %p152, %p153
      %p155 = scmp.ne.s32.totalorder %s141, %s142
      %p156 = scmp.eq.s32.totalorder %s24, 1
      %p157 = por %p155, %p156
      %p159 = scmp.ne.s32.totalorder %s142, %s158
      %p160 = scmp.eq.s32.totalorder %s24, 0
      %p161 = por %p159, %p160
      %p162 = scmp.le.s32.totalorder 1, %s18
      %p163 = scmp.lt.s32.totalorder %s18, 3
      %p164 = pnand %p162, %p163
      %p165 = pneg %p164
      // Predicated region
      $region9: #{tpu_custom_call.1} parent=5 // pred_check
        _
      $region10: #{tpu_custom_call.1} parent=5 // pred_check_branch
        %167 = sbr.rel (%p164) target = $region12
      $region11: #{tpu_custom_call.1} parent=5 // pred_region
        %s168 = ssub.s32 %s18, 1
        // Predicated region
        $region13: #{tpu_custom_call.1} parent=11 // pred_check
          %p169 = pneg %p65
        $region14: #{tpu_custom_call.1} parent=11 // pred_check_branch
          %171 = sbr.rel (%p169) target = $region16
        $region15: #{tpu_custom_call.1} parent=11 // pred_region
          %s173 = ssub.s32 256, 256
          %174 = vsyncadd [#allocation6], %s173
          %s175 = sshll.u32 [#allocation5], 4
          %s176 = int_to_ptr.vmem [resolvable:$true] %s175
          %181 = dma.hbm_to_vmem [thread:$0]  %s1, 256, %s176, [#allocation6], 64, 64, 4
        $region16: #{tpu_custom_call.1} parent=11 // pred_fallthru
          _
        // Predicated region
        $region17: #{tpu_custom_call.1} parent=11 // pred_check
          %p182 = pneg %p86
        $region18: #{tpu_custom_call.1} parent=11 // pred_check_branch
          %184 = sbr.rel (%p182) target = $region20
        $region19: #{tpu_custom_call.1} parent=11 // pred_region
          _
        $region20: #{tpu_custom_call.1} parent=11 // pred_fallthru
          _
        // Predicated region
        $region21: #{tpu_custom_call.1} parent=11 // pred_check
          %p185 = pneg %p107
        $region22: #{tpu_custom_call.1} parent=11 // pred_check_branch
          %187 = sbr.rel (%p185) target = $region24
        $region23: #{tpu_custom_call.1} parent=11 // pred_region
          %s189 = ssub.s32 1024, 1024
          %190 = vsyncadd [#allocation6], %s189
          %s191 = sshll.u32 [#allocation7], 4
          %s192 = int_to_ptr.vmem [resolvable:$true] %s191
          %197 = dma.hbm_to_vmem [thread:$0]  %s3, 1024, %s192, [#allocation6], 64, 64, 4
        $region24: #{tpu_custom_call.1} parent=11 // pred_fallthru
          _
        // Predicated region
        $region25: #{tpu_custom_call.1} parent=11 // pred_check
          %p198 = pneg %p128
        $region26: #{tpu_custom_call.1} parent=11 // pred_check_branch
          %200 = sbr.rel (%p198) target = $region28
        $region27: #{tpu_custom_call.1} parent=11 // pred_region
          _
        $region28: #{tpu_custom_call.1} parent=11 // pred_fallthru
          _
      $region12: #{tpu_custom_call.1} parent=5 // pred_fallthru
        _
      %p201 = scmp.lt.s32.totalorder %s18, 2
      // Predicated region
      $region29: #{tpu_custom_call.1} parent=5 // pred_check
        %p202 = pneg %p201
      $region30: #{tpu_custom_call.1} parent=5 // pred_check_branch
        %204 = sbr.rel (%p202) target = $region32
      $region31: #{tpu_custom_call.1} parent=5 // pred_region
        // Predicated region
        $region33: #{tpu_custom_call.1} parent=31 // pred_check
          %p205 = pneg %p38
        $region34: #{tpu_custom_call.1} parent=31 // pred_check_branch
          %207 = sbr.rel (%p205) target = $region36
        $region35: #{tpu_custom_call.1} parent=31 // pred_region
          %s208 = sand.u32 %s28, 1
          %s209 = scalar_lea.sflag [#allocation3], %s208
          %s210 = sand.u32 %s28, 1
          %s211 = smul.addr %s210, 8
          %s212 = scalar_lea.vmem [#allocation2], %s211
          %s213 = smul.u32 2, %s18
          %s215 = ssub.s32 128, 128
          %216 = vsyncadd %s209, %s215
          %s217 = smul.addr %s213, 64
          %s218 = scalar_lea.hbm %s0, %s217
          %s219 = sshll.u32 %s212, 4
          %s220 = int_to_ptr.vmem [resolvable:$true] %s219
          %225 = dma.hbm_to_vmem [thread:$0]  %s218, 128, %s220, %s209, 64, 64, 4
        $region36: #{tpu_custom_call.1} parent=31 // pred_fallthru
          _
      $region32: #{tpu_custom_call.1} parent=5 // pred_fallthru
        _
      %p226 = scmp.le.s32.totalorder 1, %s18
      %p227 = scmp.lt.s32.totalorder %s18, 3
      %p228 = pnand %p226, %p227
      %p229 = pneg %p228
      // Predicated region
      $region37: #{tpu_custom_call.1} parent=5 // pred_check
        _
      $region38: #{tpu_custom_call.1} parent=5 // pred_check_branch
        %231 = sbr.rel (%p228) target = $region40
      $region39: #{tpu_custom_call.1} parent=5 // pred_region
        %s232 = ssub.s32 %s18, 1
        %s233 = sand.u32 %s31, 1
        %s234 = scalar_lea.sflag [#allocation3], %s233
        %s235 = sand.u32 %s31, 1
        %s236 = smul.addr %s235, 8
        %s237 = scalar_lea.vmem [#allocation2], %s236
        // Predicated region
        $region41: #{tpu_custom_call.1} parent=39 // pred_check
          %p238 = pneg %p44
        $region42: #{tpu_custom_call.1} parent=39 // pred_check_branch
          %240 = sbr.rel (%p238) target = $region44
        $region43: #{tpu_custom_call.1} parent=39 // pred_region
          %241 = dma.done %s234, 128
        $region44: #{tpu_custom_call.1} parent=39 // pred_fallthru
          _
        // Predicated region
        $region45: #{tpu_custom_call.1} parent=39 // pred_check
          %p242 = pneg %p65
        $region46: #{tpu_custom_call.1} parent=39 // pred_check_branch
          %244 = sbr.rel (%p242) target = $region48
        $region47: #{tpu_custom_call.1} parent=39 // pred_region
          %245 = dma.done [#allocation6], 256
        $region48: #{tpu_custom_call.1} parent=39 // pred_fallthru
          _
        // Predicated region
        $region49: #{tpu_custom_call.1} parent=39 // pred_check
          %p246 = pneg %p107
        $region50: #{tpu_custom_call.1} parent=39 // pred_check_branch
          %248 = sbr.rel (%p246) target = $region52
        $region51: #{tpu_custom_call.1} parent=39 // pred_region
          %249 = dma.done [#allocation6], 1024
        $region52: #{tpu_custom_call.1} parent=39 // pred_fallthru
          _
        %s250 = sand.u32 %s31, 1
        %s251 = scalar_lea.sflag [#allocation3], %s250
        %s252 = sand.u32 %s31, 1
        %s253 = smul.addr %s252, 8
        %s254 = scalar_lea.vmem [#allocation2], %s253
        %p255 = pneg %p44
        %p256 = pneg %p41
        %p257 = pneg %p65
        %p258 = pneg %p62
        %p259 = pneg %p86
        %p260 = pneg %p83
        %p261 = pneg %p107
        %p262 = pneg %p104
        %p263 = pneg %p128
        %p264 = pneg %p125
        %p265 = pneg %p154
        %p266 = pneg %p151
        %s267 = sand.u32 %s141, 1
        %s268 = scalar_lea.sflag [#allocation4], %s267
        %s269 = sand.u32 %s141, 1
        %s270 = smul.addr %s269, 16
        %s271 = scalar_lea.vmem [#allocation8], %s270
        %s272 = smul.u32 2, %s23
        %s273 = smul.u32 2, %s23
        %v275 = vld [vmem:[%s237] sm:$0xf]
        %v276 = vld [vmem:[%s237 + $0x4] sm:$0xf]
        %v277 = vld [vmem:[#allocation5] sm:$0xf]
        %v278 = vld [vmem:[#allocation5 + $0x4] sm:$0xf]
        %v279 = vld [vmem:[#allocation5 + $0x8] sm:$0xf]
        %v280 = vld [vmem:[#allocation5 + $0xc] sm:$0xf]
        %v281 = vld [vmem:[%s2] sm:$0x1]
        %v283 = vlaneseq
        %v284 = vshrl.u32 %v283, 7
        %v285 = vsub.s32 0, %v284
        %v286 = vrot.slane %v281, %v285
        %v290 = vunpack.c.l.b16 %v275
        %v291 = vunpack.c.l.b16 %v276
        %v292 = vpack.c.b16 %v291, %v290
        %v297 = vunpack.c.l.b16 %v277
        %v298 = vunpack.c.l.b16 %v278
        %v299 = vunpack.c.l.b16 %v279
        %v300 = vunpack.c.l.b16 %v280
        %v301 = vpack.c.b16 %v298, %v297
        %v302 = vpack.c.b16 %v300, %v299
        %vm305 = vcmask 261120
        %v307 = vsel %vm305, %v292, 0
        %309 = vmatprep.subr.bf16.mxu0 0
        %310 = vmatpush1.bf16.msra.mxu0 %v301
        %311 = vmatprep.subr.bf16.mxu0 0
        %312 = vmatpush1.bf16.msra.mxu0 %v302
        %313 = vmatprep.subr.bf16.mxu0 0
        %314 = vmatpush1.bf16.msra.mxu0 0
        %315 = vmatprep.subr.bf16.mxu0 0
        %316 = vmatpush1.bf16.msra.mxu0 0
        %317 = vmatprep.subr.bf16.mxu0 0
        %318 = vmatpush1.bf16.msra.mxu0 0
        %319 = vmatprep.subr.bf16.mxu0 0
        %320 = vmatpush1.bf16.msra.mxu0 0
        %321 = vmatprep.subr.bf16.mxu0 0
        %322 = vmatpush1.bf16.msra.mxu0 0
        %323 = vmatprep.subr.bf16.mxu0 0
        %324 = vmatpush1.bf16.msra.mxu0 0
        %325 = vmatprep.subr.bf16.mxu0 0
        %326 = vmatpush1.bf16.msra.mxu0 0
        %327 = vmatprep.subr.bf16.mxu0 0
        %328 = vmatpush1.bf16.msra.mxu0 0
        %329 = vmatprep.subr.bf16.mxu0 0
        %330 = vmatpush1.bf16.msra.mxu0 0
        %331 = vmatprep.subr.bf16.mxu0 0
        %332 = vmatpush1.bf16.msra.mxu0 0
        %333 = vmatprep.subr.bf16.mxu0 0
        %334 = vmatpush1.bf16.msra.mxu0 0
        %335 = vmatprep.subr.bf16.mxu0 0
        %336 = vmatpush1.bf16.msra.mxu0 0
        %337 = vmatprep.subr.bf16.mxu0 0
        %338 = vmatpush1.bf16.msra.mxu0 0
        %339 = vmatprep.subr.bf16.mxu0 0
        %340 = vmatpush1.bf16.msra.mxu0 0
        %341 = vmatprep.mubr.bf16.mxu0 0
        %342 = vmatmul.mubr.bf16.gmra.mrb[0].mxu0 %v307
        %v343 = vpop.f32.mrb[0].mxu0
        %v344 = vadd.f32 %v286, %v343
        %v345 = vpop.f32.mrb[0].mxu0
        %v346 = vpop.f32.mrb[0].mxu0
        %v347 = vadd.f32 %v286, %v346
        %v348 = vpop.f32.mrb[0].mxu0
        %349 = vdwg.mxu0
        %v350 = vmax.f32 %v344, 0.0
        %v351 = vmax.f32 %v347, 0.0
        %v352 = vpack.c.bf16 %v351, %v350
        %v353 = vld [vmem:[#allocation7] sm:$0xf]
        %v354 = vld [vmem:[#allocation7 + $0x4] sm:$0xf]
        %v355 = vld [vmem:[#allocation7 + $0x8] sm:$0xf]
        %v356 = vld [vmem:[#allocation7 + $0xc] sm:$0xf]
        %v357 = vld [vmem:[#allocation7 + $0x10] sm:$0xf]
        %v358 = vld [vmem:[#allocation7 + $0x14] sm:$0xf]
        %v359 = vld [vmem:[#allocation7 + $0x18] sm:$0xf]
        %v360 = vld [vmem:[#allocation7 + $0x1c] sm:$0xf]
        %v361 = vld [vmem:[#allocation7 + $0x20] sm:$0xf]
        %v362 = vld [vmem:[#allocation7 + $0x24] sm:$0xf]
        %v363 = vld [vmem:[#allocation7 + $0x28] sm:$0xf]
        %v364 = vld [vmem:[#allocation7 + $0x2c] sm:$0xf]
        %v365 = vld [vmem:[#allocation7 + $0x30] sm:$0xf]
        %v366 = vld [vmem:[#allocation7 + $0x34] sm:$0xf]
        %v367 = vld [vmem:[#allocation7 + $0x38] sm:$0xf]
        %v368 = vld [vmem:[#allocation7 + $0x3c] sm:$0xf]
        %v369 = vld [vmem:[%s4] sm:$0x1]
        %v371 = vlaneseq
        %v372 = vshrl.u32 %v371, 7
        %v373 = vsub.s32 0, %v372
        %v374 = vrot.slane %v369, %v373
        %v392 = vunpack.c.l.b16 %v353
        %v393 = vunpack.c.l.b16 %v354
        %v394 = vunpack.c.l.b16 %v355
        %v395 = vunpack.c.l.b16 %v356
        %v396 = vunpack.c.l.b16 %v357
        %v397 = vunpack.c.l.b16 %v358
        %v398 = vunpack.c.l.b16 %v359
        %v399 = vunpack.c.l.b16 %v360
        %v400 = vunpack.c.l.b16 %v361
        %v401 = vunpack.c.l.b16 %v362
        %v402 = vunpack.c.l.b16 %v363
        %v403 = vunpack.c.l.b16 %v364
        %v404 = vunpack.c.l.b16 %v365
        %v405 = vunpack.c.l.b16 %v366
        %v406 = vunpack.c.l.b16 %v367
        %v407 = vunpack.c.l.b16 %v368
        %v408 = vpack.c.b16 %v393, %v392
        %v409 = vpack.c.b16 %v395, %v394
        %v410 = vpack.c.b16 %v397, %v396
        %v411 = vpack.c.b16 %v399, %v398
        %v412 = vpack.c.b16 %v401, %v400
        %v413 = vpack.c.b16 %v403, %v402
        %v414 = vpack.c.b16 %v405, %v404
        %v415 = vpack.c.b16 %v407, %v406
        %424 = vmatprep.subr.bf16.mxu0 0
        %425 = vmatpush1.bf16.msra.mxu0 %v408
        %426 = vmatprep.subr.bf16.mxu0 0
        %427 = vmatpush1.bf16.msra.mxu0 %v409
        %428 = vmatprep.subr.bf16.mxu0 0
        %429 = vmatpush1.bf16.msra.mxu0 %v410
        %430 = vmatprep.subr.bf16.mxu0 0
        %431 = vmatpush1.bf16.msra.mxu0 %v411
        %432 = vmatprep.subr.bf16.mxu0 0
        %433 = vmatpush1.bf16.msra.mxu0 %v412
        %434 = vmatprep.subr.bf16.mxu0 0
        %435 = vmatpush1.bf16.msra.mxu0 %v413
        %436 = vmatprep.subr.bf16.mxu0 0
        %437 = vmatpush1.bf16.msra.mxu0 %v414
        %438 = vmatprep.subr.bf16.mxu0 0
        %439 = vmatpush1.bf16.msra.mxu0 %v415
        %440 = vmatprep.subr.bf16.mxu0 0
        %441 = vmatpush1.bf16.msra.mxu0 0
        %442 = vmatprep.subr.bf16.mxu0 0
        %443 = vmatpush1.bf16.msra.mxu0 0
        %444 = vmatprep.subr.bf16.mxu0 0
        %445 = vmatpush1.bf16.msra.mxu0 0
        %446 = vmatprep.subr.bf16.mxu0 0
        %447 = vmatpush1.bf16.msra.mxu0 0
        %448 = vmatprep.subr.bf16.mxu0 0
        %449 = vmatpush1.bf16.msra.mxu0 0
        %450 = vmatprep.subr.bf16.mxu0 0
        %451 = vmatpush1.bf16.msra.mxu0 0
        %452 = vmatprep.subr.bf16.mxu0 0
        %453 = vmatpush1.bf16.msra.mxu0 0
        %454 = vmatprep.subr.bf16.mxu0 0
        %455 = vmatpush1.bf16.msra.mxu0 0
        %456 = vmatprep.mubr.bf16.mxu0 0
        %457 = vmatmul.mubr.bf16.gmra.mrb[0].mxu0 %v352
        %v458 = vpop.f32.mrb[0].mxu0
        %v459 = vadd.f32 %v374, %v458
        %v460 = vpop.f32.mrb[0].mxu0
        %v461 = vpop.f32.mrb[0].mxu0
        %v462 = vadd.f32 %v374, %v461
        %v463 = vpop.f32.mrb[0].mxu0
        %464 = vdwg.mxu0
        %465 = vst [vmem:[%s271] sm:$0xff] %v459
        %466 = vst [vmem:[%s271 + $0x8] sm:$0xff] %v462
        %s467 = sand.u32 %s141, 1
        %s468 = scalar_lea.sflag [#allocation4], %s467
        %s469 = sand.u32 %s141, 1
        %s470 = smul.addr %s469, 16
        %s471 = scalar_lea.vmem [#allocation8], %s470
        // Predicated region
        $region53: #{tpu_custom_call.1} parent=39 // pred_check
          %p472 = pneg %p151
        $region54: #{tpu_custom_call.1} parent=39 // pred_check_branch
          %474 = sbr.rel (%p472) target = $region56
        $region55: #{tpu_custom_call.1} parent=39 // pred_region
          %s475 = smul.u32 2, %s23
          %s477 = ssub.s32 256, 256
          %478 = vsyncadd %s468, %s477
          %s479 = smul.addr %s475, 128
          %s480 = scalar_lea.hbm %s5, %s479
          %s481 = sshll.u32 %s471, 4
          %s482 = int_to_ptr.vmem [resolvable:$true] %s481
          %487 = dma.vmem_to_hbm [thread:$0]  %s482, 256, %s480, %s468, 128, 128, 8
        $region56: #{tpu_custom_call.1} parent=39 // pred_fallthru
          _
      $region40: #{tpu_custom_call.1} parent=5 // pred_fallthru
        _
      %p488 = scmp.le.s32.totalorder 2, %s18
      // Predicated region
      $region57: #{tpu_custom_call.1} parent=5 // pred_check
        %p489 = pneg %p488
      $region58: #{tpu_custom_call.1} parent=5 // pred_check_branch
        %491 = sbr.rel (%p489) target = $region60
      $region59: #{tpu_custom_call.1} parent=5 // pred_region
        %s492 = ssub.s32 %s18, 2
        // Predicated region
        $region61: #{tpu_custom_call.1} parent=59 // pred_check
          %p493 = pneg %p157
        $region62: #{tpu_custom_call.1} parent=59 // pred_check_branch
          %495 = sbr.rel (%p493) target = $region64
        $region63: #{tpu_custom_call.1} parent=59 // pred_region
          %s496 = sand.u32 %s142, 1
          %s497 = scalar_lea.sflag [#allocation4], %s496
          %s498 = sand.u32 %s142, 1
          %s499 = smul.addr %s498, 16
          %s500 = scalar_lea.vmem [#allocation8], %s499
          %501 = dma.done %s497, 256
        $region64: #{tpu_custom_call.1} parent=59 // pred_fallthru
          _
      $region60: #{tpu_custom_call.1} parent=5 // pred_fallthru
        _
    $region6: #{tpu_custom_call.1} parent=1 // loop_footer
      %s22 = sadd.s32 1, %s18
    $region7: #{tpu_custom_call.1} parent=1 // loop_footer_branch
      %17 = sbr.rel target = $region3
    $region8: #{tpu_custom_call.1} parent=1 // loop_exit
      _
    %502 = vsyncpa [#allocation3], 1
    %s503 = scalar_lea.sflag [#allocation3], 1
    %504 = vsyncpa %s503, 1
    %505 = vsyncpa [#allocation6], 1
    %506 = vsyncpa [#allocation4], 1
    %s507 = scalar_lea.sflag [#allocation4], 1
    %508 = vsyncpa %s507, 1

</llo_original>
